<compile_context>
chip_gen: v7x
topology: tpu7x:2x2x1
jax: 0.10.0
libtpu: 0.0.40
codegen_flags: <defaults>
</compile_context>

<pallas_src>
import math
import numpy as np
import jax
import jax.numpy as jnp
from jax import lax
from jax.experimental import pallas as pl
from jax.experimental.pallas import tpu as pltpu  # noqa: F401  (not needed at this tiny size)

# ---- problem sizes (small, consistent with the module) ----
B = 2                      # batch
S = 8                      # seq_len
DIM = 32                   # model dim
NUM_HEADS = 4
HEAD_DIM = DIM // NUM_HEADS          # 8
SCALE = HEAD_DIM ** 0.5              # self.scale
S_QK_SCALE = 1.0 / math.sqrt(DIM)
S_QK_INIT = 1.0

N = B * S                            # 16 token rows (batch folded into rows)
M = NUM_HEADS * N                    # 64 stacked rows, ordered (head, batch, seq)
NEG = -1e30                          # additive mask value (finite, exp underflows to 0)

# ---- static structural constants (numpy, built once; constant-folded under jit) ----
_half = HEAD_DIM // 2
_rb = np.zeros((HEAD_DIM, HEAD_DIM), np.float32)
for _j in range(_half):
    _rb[_j + _half, _j] = -1.0       # out[j]      = -x[j+half]
    _rb[_j, _j + _half] = 1.0        # out[j+half] =  x[j]
ROT_NP = np.kron(np.eye(NUM_HEADS, dtype=np.float32), _rb)                      # (DIM, DIM)
HSEL_NP = np.kron(np.eye(NUM_HEADS, dtype=np.float32),
                  np.ones((HEAD_DIM, HEAD_DIM), np.float32))                    # (DIM, DIM)

_col_head = np.arange(DIM) // HEAD_DIM           # (DIM,)
_row = np.arange(M)
_row_head = _row // N
_row_b = (_row % N) // S
ROW_S = _row % S                                 # (M,)
_col = np.arange(N)
_col_b = _col // S
COL_S = _col % S                                 # (N,)
HEAD_MATCH_NP = (_row_head[:, None] == _col_head[None, :]).astype(np.float32)   # (M, DIM)
BATCH_MATCH_NP = (_row_b[:, None] == _col_b[None, :])                           # (M, N) bool


def attn_kernel(x_ref, wqkv_ref, wo_ref, rope_ref, cos_ref, sin_ref,
                hsel_ref, qmask_ref, smask_ref, bias_ref, o_ref):
    x = x_ref[...]                                                     # (N, DIM)

    # Fused Q/K/V projection: one MXU push at 16 rows.
    qkv = jnp.dot(x, wqkv_ref[...], preferred_element_type=jnp.float32)  # (N, 3*DIM)
    q = qkv[:, :DIM]
    k = qkv[:, DIM:2 * DIM]
    v = qkv[:, 2 * DIM:]

    # RoPE as a signed block-diagonal permutation matmul (rotate-half), full width.
    cos = cos_ref[...]
    sin = sin_ref[...]
    rot = rope_ref[...]
    q = q * cos + jnp.dot(q, rot, preferred_element_type=jnp.float32) * sin
    k = k * cos + jnp.dot(k, rot, preferred_element_type=jnp.float32) * sin

    # Per-head cosine norm: per-head sum-of-squares via block-of-ones matmul,
    # then rsqrt (EUP).  max(ss, 1e-12) == clamp(norm, min=1e-6) on the norm.
    hsel = hsel_ref[...]
    q = q * lax.rsqrt(jnp.maximum(
        jnp.dot(q * q, hsel, preferred_element_type=jnp.float32), 1e-12))
    k = k * lax.rsqrt(jnp.maximum(
        jnp.dot(k * k, hsel, preferred_element_type=jnp.float32), 1e-12))

    # Replicate q across the 4 head row-blocks (sublane-aligned concat of vregs)
    # and fold head-selection, eff_s_qk^2 and sqrt(head_dim) into one mask.
    qm = jnp.concatenate([q] * NUM_HEADS, axis=0) * qmask_ref[...]     # (M, DIM)

    # Logits: qm row (h,b,s) dot the full k row (b',s') picks the head-h block
    # (non-head lanes of qm are zero), so k never needs replication.
    logits = lax.dot_general(qm, k, (((1,), (1,)), ((), ())),
                             preferred_element_type=jnp.float32)       # (M, N)

    # No row-max subtraction: cosine norm bounds |logits| <= SCALE*max(eff)^2 ~ 2.8.
    # TODO(synk): reinstate the running-max if s_qk becomes a trained, growing scale.
    p = jnp.exp(logits + bias_ref[...])     # masked entries: exp(-1e30) == 0
    denom = jnp.sum(p, axis=-1, keepdims=True)
    r = pl.reciprocal(denom, approx=True)
    r = r * (2.0 - denom * r)               # one Newton step -> well within 1e-4 tol

    # probs @ V (v is un-replicated (N, DIM)).
    scores = jnp.dot(p, v, preferred_element_type=jnp.float32) * r     # (M, DIM)
    scores = scores * smask_ref[...]        # zero wrong-head lanes

    # Recombine head row-blocks into (N, DIM) BEFORE Wo: each lane keeps exactly
    # one head's contribution, so the sum reproduces the concatenated heads.
    combined = (scores[0:N] + scores[N:2 * N]
                + scores[2 * N:3 * N] + scores[3 * N:4 * N])           # (N, DIM)

    o_ref[...] = jnp.dot(combined, wo_ref[...],
                         preferred_element_type=jnp.float32)           # (N, DIM)


@jax.jit
def self_attention_pallas(x, wq_t, wk_t, wv_t, wo_t, s_qk, sin2d, cos2d, mask_bool):
    """x: (B, S, DIM); w*_t pre-transposed so y = x @ W_t; sin2d/cos2d: (S, HEAD_DIM);
    mask_bool: (S, S) boolean, True = keep."""
    x_flat = x.reshape(N, DIM)
    w_qkv = jnp.concatenate([wq_t, wk_t, wv_t], axis=1)      # (DIM, 3*DIM)

    # sin/cos tiled across head lanes and across batch rows -> (N, DIM).
    sin_rep = jnp.tile(jnp.tile(sin2d, (1, NUM_HEADS)), (B, 1))
    cos_rep = jnp.tile(jnp.tile(cos2d, (1, NUM_HEADS)), (B, 1))

    # Head-selection mask on replicated q with eff_s_qk^2 and sqrt(head_dim) folded in.
    eff = (s_qk * (S_QK_INIT / S_QK_SCALE)).reshape(-1)      # (DIM,) head-major
    q_headmask = jnp.asarray(HEAD_MATCH_NP) * (eff * eff)[None, :] * jnp.float32(SCALE)
    s_headmask = jnp.asarray(HEAD_MATCH_NP)

    # Additive bias: keep iff same batch AND causal (head handled by q masking).
    keep = jnp.asarray(BATCH_MATCH_NP) & mask_bool[ROW_S[:, None], COL_S[None, :]]
    bias = jnp.where(keep, 0.0, NEG).astype(jnp.float32)     # (M, N)

    # Single invocation, no grid: all operands (~60 KB) live whole in VMEM.
    out_flat = pl.pallas_call(
        attn_kernel,
        out_shape=jax.ShapeDtypeStruct((N, DIM), jnp.float32),
    )(x_flat, w_qkv, wo_t, jnp.asarray(ROT_NP), cos_rep, sin_rep,
      jnp.asarray(HSEL_NP), q_headmask, s_headmask, bias)

    return out_flat.reshape(B, S, DIM)


# ---------- pure-JAX reference replicating the PyTorch forward ----------
def reference(x, wq_t, wk_t, wv_t, wo_t, s_qk, sin4, cos4, mask_bool4):
    b, s, _ = x.shape
    q = x @ wq_t
    k = x @ wk_t
    v = x @ wv_t
    q = q.reshape(b, s, NUM_HEADS, HEAD_DIM)
    k = k.reshape(b, s, NUM_HEADS, HEAD_DIM)
    v = v.reshape(b, s, NUM_HEADS, HEAD_DIM)

    def rope4(t):
        t1, t2 = t[..., : HEAD_DIM // 2], t[..., HEAD_DIM // 2:]
        return t * cos4 + jnp.concatenate([-t2, t1], axis=-1) * sin4

    q = rope4(q)
    k = rope4(k)
    eff = s_qk * (S_QK_INIT / S_QK_SCALE)

    def cnorm(t):
        n = jnp.maximum(jnp.linalg.norm(t, axis=-1, keepdims=True), 1e-6)
        return t / n

    q = cnorm(q) * eff
    k = cnorm(k) * eff
    q = jnp.transpose(q, (0, 2, 1, 3))
    k = jnp.transpose(k, (0, 2, 1, 3))
    v = jnp.transpose(v, (0, 2, 1, 3))
    logits = jnp.einsum("bhqd,bhkd->bhqk", q, k) * SCALE
    logits = jnp.where(mask_bool4, logits, -jnp.inf)
    probs = jax.nn.softmax(logits, axis=-1)
    scores = jnp.einsum("bhqk,bhkd->bhqd", probs, v)
    scores = jnp.transpose(scores, (0, 2, 1, 3)).reshape(b, s, DIM)
    return scores @ wo_t


if __name__ == "__main__":
    key = jax.random.PRNGKey(0)
    kx, kq, kk, kv, ko = jax.random.split(key, 5)

    x = jax.random.normal(kx, (B, S, DIM), dtype=jnp.float32)

    # deterministic "Linear" weights, already transposed: y = x @ W_t
    init_std = 0.02
    wq_t = init_std * jax.random.normal(kq, (DIM, DIM), dtype=jnp.float32)
    wk_t = init_std * jax.random.normal(kk, (DIM, DIM), dtype=jnp.float32)
    wv_t = init_std * jax.random.normal(kv, (DIM, DIM), dtype=jnp.float32)
    wo_t = init_std * jax.random.normal(ko, (DIM, DIM), dtype=jnp.float32)

    # s_qk parameter as in __init__: ones * (1/sqrt(dim))
    s_qk = jnp.ones((NUM_HEADS, HEAD_DIM), dtype=jnp.float32) * S_QK_SCALE

    # RoPE frequencies (rotate-half convention)
    inv_freq = 1.0 / (10000.0 ** (jnp.arange(0, HEAD_DIM, 2, dtype=jnp.float32)
                                  / HEAD_DIM))                            # (HEAD_DIM/2,)
    pos = jnp.arange(S, dtype=jnp.float32)[:, None]                       # (S, 1)
    angles = pos * inv_freq[None, :]                                      # (S, HEAD_DIM/2)
    sin2d = jnp.concatenate([jnp.sin(angles), jnp.sin(angles)], axis=-1)  # (S, HEAD_DIM)
    cos2d = jnp.concatenate([jnp.cos(angles), jnp.cos(angles)], axis=-1)  # (S, HEAD_DIM)
    sin4 = sin2d[None, :, None, :]   # freqs['sin'] with shape (1, S, 1, HEAD_DIM)
    cos4 = cos2d[None, :, None, :]

    # causal attention mask (True = keep), as the PyTorch forward expects
    mask2d = jnp.tril(jnp.ones((S, S), dtype=bool))                       # (S, S)
    mask_bool4 = mask2d[None, None, :, :]

    out = self_attention_pallas(x, wq_t, wk_t, wv_t, wo_t,
                                s_qk, sin2d, cos2d, mask2d)
    out = jax.block_until_ready(out)

    ref = reference(x, wq_t, wk_t, wv_t, wo_t, s_qk, sin4, cos4, mask_bool4)
    assert out.shape == (B, S, DIM)
    assert jnp.allclose(out, ref, atol=1e-4, rtol=1e-4), "mismatch vs reference"

    print("KERNEL_OK")
</pallas_src>

<mosaic_0001>
module attributes {stable_mosaic.version = 11 : i64} {
  func.func @attn_kernel(%arg0: memref<16x32xf32, #tpu.memory_space<vmem>>, %arg1: memref<32x96xf32, #tpu.memory_space<vmem>>, %arg2: memref<32x32xf32, #tpu.memory_space<vmem>>, %arg3: memref<32x32xf32, #tpu.memory_space<vmem>>, %arg4: memref<16x32xf32, #tpu.memory_space<vmem>>, %arg5: memref<16x32xf32, #tpu.memory_space<vmem>>, %arg6: memref<32x32xf32, #tpu.memory_space<vmem>>, %arg7: memref<64x32xf32, #tpu.memory_space<vmem>>, %arg8: memref<64x32xf32, #tpu.memory_space<vmem>>, %arg9: memref<64x16xf32, #tpu.memory_space<vmem>>, %arg10: memref<16x32xf32, #tpu.memory_space<vmem>>) attributes {dimension_semantics = [], scalar_prefetch = 0 : i64, scratch_operands = 0 : i64, tpu.core_type = #tpu.core_type<tc>} {
    %c0 = arith.constant 0 : index
    %c0_0 = arith.constant 0 : index
    %0 = vector.load %arg0[%c0, %c0_0] : memref<16x32xf32, #tpu.memory_space<vmem>>, vector<16x32xf32>
    %c0_1 = arith.constant 0 : index
    %c0_2 = arith.constant 0 : index
    %1 = vector.load %arg1[%c0_1, %c0_2] : memref<32x96xf32, #tpu.memory_space<vmem>>, vector<32x96xf32>
    %cst = arith.constant dense<0.000000e+00> : vector<16x96xf32>
    %2 = tpu.matmul %0, %1, %cst {dimension_numbers = #tpu.dot_dimension_numbers<[1], [0], [0], [1], [0, 0, 1, 1], [], []>} : vector<16x32xf32>, vector<32x96xf32>, vector<16x96xf32> -> vector<16x96xf32>
    %3 = vector.extract_strided_slice %2 {offsets = [0, 0], sizes = [16, 32], strides = [1, 1]} : vector<16x96xf32> to vector<16x32xf32>
    %4 = vector.extract_strided_slice %2 {offsets = [0, 32], sizes = [16, 32], strides = [1, 1]} : vector<16x96xf32> to vector<16x32xf32>
    %5 = vector.extract_strided_slice %2 {offsets = [0, 64], sizes = [16, 32], strides = [1, 1]} : vector<16x96xf32> to vector<16x32xf32>
    %c0_3 = arith.constant 0 : index
    %c0_4 = arith.constant 0 : index
    %6 = vector.load %arg4[%c0_3, %c0_4] : memref<16x32xf32, #tpu.memory_space<vmem>>, vector<16x32xf32>
    %c0_5 = arith.constant 0 : index
    %c0_6 = arith.constant 0 : index
    %7 = vector.load %arg5[%c0_5, %c0_6] : memref<16x32xf32, #tpu.memory_space<vmem>>, vector<16x32xf32>
    %c0_7 = arith.constant 0 : index
    %c0_8 = arith.constant 0 : index
    %8 = vector.load %arg3[%c0_7, %c0_8] : memref<32x32xf32, #tpu.memory_space<vmem>>, vector<32x32xf32>
    %9 = arith.mulf %3, %6 : vector<16x32xf32>
    %cst_9 = arith.constant dense<0.000000e+00> : vector<16x32xf32>
    %10 = tpu.matmul %3, %8, %cst_9 {dimension_numbers = #tpu.dot_dimension_numbers<[1], [0], [0], [1], [0, 0, 1, 1], [], []>} : vector<16x32xf32>, vector<32x32xf32>, vector<16x32xf32> -> vector<16x32xf32>
    %11 = arith.mulf %10, %7 : vector<16x32xf32>
    %12 = arith.addf %9, %11 : vector<16x32xf32>
    %13 = arith.mulf %4, %6 : vector<16x32xf32>
    %cst_10 = arith.constant dense<0.000000e+00> : vector<16x32xf32>
    %14 = tpu.matmul %4, %8, %cst_10 {dimension_numbers = #tpu.dot_dimension_numbers<[1], [0], [0], [1], [0, 0, 1, 1], [], []>} : vector<16x32xf32>, vector<32x32xf32>, vector<16x32xf32> -> vector<16x32xf32>
    %15 = arith.mulf %14, %7 : vector<16x32xf32>
    %16 = arith.addf %13, %15 : vector<16x32xf32>
    %c0_11 = arith.constant 0 : index
    %c0_12 = arith.constant 0 : index
    %17 = vector.load %arg6[%c0_11, %c0_12] : memref<32x32xf32, #tpu.memory_space<vmem>>, vector<32x32xf32>
    %18 = arith.mulf %12, %12 : vector<16x32xf32>
    %cst_13 = arith.constant dense<0.000000e+00> : vector<16x32xf32>
    %19 = tpu.matmul %18, %17, %cst_13 {dimension_numbers = #tpu.dot_dimension_numbers<[1], [0], [0], [1], [0, 0, 1, 1], [], []>} : vector<16x32xf32>, vector<32x32xf32>, vector<16x32xf32> -> vector<16x32xf32>
    %cst_14 = arith.constant 9.99999996E-13 : f32
    %20 = vector.broadcast %cst_14 : f32 to vector<16x32xf32>
    %21 = arith.maximumf %19, %20 : vector<16x32xf32>
    %22 = math.rsqrt %21 : vector<16x32xf32>
    %23 = arith.mulf %12, %22 : vector<16x32xf32>
    %24 = arith.mulf %16, %16 : vector<16x32xf32>
    %cst_15 = arith.constant dense<0.000000e+00> : vector<16x32xf32>
    %25 = tpu.matmul %24, %17, %cst_15 {dimension_numbers = #tpu.dot_dimension_numbers<[1], [0], [0], [1], [0, 0, 1, 1], [], []>} : vector<16x32xf32>, vector<32x32xf32>, vector<16x32xf32> -> vector<16x32xf32>
    %cst_16 = arith.constant 9.99999996E-13 : f32
    %26 = vector.broadcast %cst_16 : f32 to vector<16x32xf32>
    %27 = arith.maximumf %25, %26 : vector<16x32xf32>
    %28 = math.rsqrt %27 : vector<16x32xf32>
    %29 = arith.mulf %16, %28 : vector<16x32xf32>
    %30 = tpu.concatenate %23, %23, %23, %23 in 0 : vector<16x32xf32>, vector<16x32xf32>, vector<16x32xf32>, vector<16x32xf32> -> vector<64x32xf32>
    %c0_17 = arith.constant 0 : index
    %c0_18 = arith.constant 0 : index
    %31 = vector.load %arg7[%c0_17, %c0_18] : memref<64x32xf32, #tpu.memory_space<vmem>>, vector<64x32xf32>
    %32 = arith.mulf %30, %31 : vector<64x32xf32>
    %cst_19 = arith.constant dense<0.000000e+00> : vector<64x16xf32>
    %33 = tpu.matmul %32, %29, %cst_19 {dimension_numbers = #tpu.dot_dimension_numbers<[1], [1], [0], [0], [0, 0, 1, 0], [], []>} : vector<64x32xf32>, vector<16x32xf32>, vector<64x16xf32> -> vector<64x16xf32>
    %c0_20 = arith.constant 0 : index
    %c0_21 = arith.constant 0 : index
    %34 = vector.load %arg9[%c0_20, %c0_21] : memref<64x16xf32, #tpu.memory_space<vmem>>, vector<64x16xf32>
    %35 = arith.addf %33, %34 : vector<64x16xf32>
    %36 = math.exp %35 : vector<64x16xf32>
    %cst_22 = arith.constant dense<0.000000e+00> : vector<64xf32>
    %37 = vector.multi_reduction <add>, %36, %cst_22 [1] : vector<64x16xf32> to vector<64xf32>
    %38 = vector.shape_cast %37 : vector<64xf32> to vector<64x1xf32>
    %39 = tpu.reciprocal %38 {approx = true} : vector<64x1xf32> -> vector<64x1xf32>
    %40 = arith.mulf %38, %39 : vector<64x1xf32>
    %cst_23 = arith.constant 2.000000e+00 : f32
    %41 = vector.broadcast %cst_23 : f32 to vector<64x1xf32>
    %42 = arith.subf %41, %40 : vector<64x1xf32>
    %43 = arith.mulf %39, %42 : vector<64x1xf32>
    %cst_24 = arith.constant dense<0.000000e+00> : vector<64x32xf32>
    %44 = tpu.matmul %36, %5, %cst_24 {dimension_numbers = #tpu.dot_dimension_numbers<[1], [0], [0], [1], [0, 0, 1, 1], [], []>} : vector<64x16xf32>, vector<16x32xf32>, vector<64x32xf32> -> vector<64x32xf32>
    %45 = vector.broadcast %43 : vector<64x1xf32> to vector<64x32xf32>
    %46 = arith.mulf %44, %45 : vector<64x32xf32>
    %c0_25 = arith.constant 0 : index
    %c0_26 = arith.constant 0 : index
    %47 = vector.load %arg8[%c0_25, %c0_26] : memref<64x32xf32, #tpu.memory_space<vmem>>, vector<64x32xf32>
    %48 = arith.mulf %46, %47 : vector<64x32xf32>
    %49 = vector.extract_strided_slice %48 {offsets = [0, 0], sizes = [16, 32], strides = [1, 1]} : vector<64x32xf32> to vector<16x32xf32>
    %50 = vector.extract_strided_slice %48 {offsets = [16, 0], sizes = [16, 32], strides = [1, 1]} : vector<64x32xf32> to vector<16x32xf32>
    %51 = arith.addf %49, %50 : vector<16x32xf32>
    %52 = vector.extract_strided_slice %48 {offsets = [32, 0], sizes = [16, 32], strides = [1, 1]} : vector<64x32xf32> to vector<16x32xf32>
    %53 = arith.addf %51, %52 : vector<16x32xf32>
    %54 = vector.extract_strided_slice %48 {offsets = [48, 0], sizes = [16, 32], strides = [1, 1]} : vector<64x32xf32> to vector<16x32xf32>
    %55 = arith.addf %53, %54 : vector<16x32xf32>
    %c0_27 = arith.constant 0 : index
    %c0_28 = arith.constant 0 : index
    %56 = vector.load %arg2[%c0_27, %c0_28] : memref<32x32xf32, #tpu.memory_space<vmem>>, vector<32x32xf32>
    %cst_29 = arith.constant dense<0.000000e+00> : vector<16x32xf32>
    %57 = tpu.matmul %55, %56, %cst_29 {dimension_numbers = #tpu.dot_dimension_numbers<[1], [0], [0], [1], [0, 0, 1, 1], [], []>} : vector<16x32xf32>, vector<32x32xf32>, vector<16x32xf32> -> vector<16x32xf32>
    %c0_30 = arith.constant 0 : index
    %c0_31 = arith.constant 0 : index
    %58 = vector.load %arg10[%c0_30, %c0_31] : memref<16x32xf32, #tpu.memory_space<vmem>>, vector<16x32xf32>
    tpu.vector_store %arg10[%c0_30, %c0_31], %57 {strides = array<i32>} : memref<16x32xf32, #tpu.memory_space<vmem>>, vector<16x32xf32>,
    return
  }
}

</mosaic_0001>

<llo_original>
// kernel: self_attention_pallas.1
$region0: #{self_attention_pallas.1}
  #allocation0 [shape = 'u32[]', space=smem, size = 0x4, offset = 0x4, fixed_abs, tag = 'smem constant byte address 0x4 - core index']
  #allocation1 [shape = 'u32[144,128]{1,0:T(1,128)}', space=vmem, size = 0x12000, scoped, tag = 'internal scratch']
  %s0 = inlined_call_operand.vmem [shape: f32[16,32], index: 0, kind: input, shape index: {}]
  %s1 = inlined_call_operand.vmem [shape: f32[32,96], index: 1, kind: input, shape index: {}]
  %s2 = inlined_call_operand.vmem [shape: f32[32,32], index: 2, kind: input, shape index: {}]
  %s3 = inlined_call_operand.vmem [shape: f32[32,32], index: 3, kind: input, shape index: {}]
  %s4 = inlined_call_operand.vmem [shape: f32[16,32], index: 4, kind: input, shape index: {}]
  %s5 = inlined_call_operand.vmem [shape: f32[16,32], index: 5, kind: input, shape index: {}]
  %s6 = inlined_call_operand.vmem [shape: f32[32,32], index: 6, kind: input, shape index: {}]
  %s7 = inlined_call_operand.vmem [shape: f32[64,32], index: 7, kind: input, shape index: {}]
  %s8 = inlined_call_operand.vmem [shape: f32[64,32], index: 8, kind: input, shape index: {}]
  %s9 = inlined_call_operand.vmem [shape: f32[64,16], index: 9, kind: input, shape index: {}]
  %s10 = inlined_call_operand.hbm [shape: f32[16,32], index: 10, kind: output, shape index: {}]
  %s11 = sld [smem:[#allocation0]]
  $region50: #{self_attention_pallas.1} parent=0
    _
  %s13 = ssub.s32 1, %s11
  %s14 = scalar_select 0, %s13, %s11
  $region1: #{self_attention_pallas.1} parent=0
    #allocation2 [shape = 'u8[8192]{0}', space=vmem, size = 0x2000, scoped, tag = 'output window, operand 0, single buffered']
    #allocation3 [shape = 's32[1]{0}', space=sflag, size = 0x4, scoped, tag = 'scoped memory for self_attention_pallas.1']
    %15 = vsyncpa [#allocation3], 0
    // Predicated region
    $region2: #{self_attention_pallas.1} parent=1 // pred_check
      _
    $region3: #{self_attention_pallas.1} parent=1 // pred_check_branch
      %17 = sbr.rel (0) target = $region5
    $region4: #{self_attention_pallas.1} parent=1 // pred_region
      _
    $region5: #{self_attention_pallas.1} parent=1 // pred_fallthru
      _
    // Predicated region
    $region6: #{self_attention_pallas.1} parent=1 // pred_check
      _
    $region7: #{self_attention_pallas.1} parent=1 // pred_check_branch
      %19 = sbr.rel (0) target = $region9
    $region8: #{self_attention_pallas.1} parent=1 // pred_region
      _
    $region9: #{self_attention_pallas.1} parent=1 // pred_fallthru
      _
    // Predicated region
    $region10: #{self_attention_pallas.1} parent=1 // pred_check
      _
    $region11: #{self_attention_pallas.1} parent=1 // pred_check_branch
      %21 = sbr.rel (0) target = $region13
    $region12: #{self_attention_pallas.1} parent=1 // pred_region
      _
    $region13: #{self_attention_pallas.1} parent=1 // pred_fallthru
      _
    // Predicated region
    $region14: #{self_attention_pallas.1} parent=1 // pred_check
      _
    $region15: #{self_attention_pallas.1} parent=1 // pred_check_branch
      %23 = sbr.rel (0) target = $region17
    $region16: #{self_attention_pallas.1} parent=1 // pred_region
      _
    $region17: #{self_attention_pallas.1} parent=1 // pred_fallthru
      _
    // Predicated region
    $region18: #{self_attention_pallas.1} parent=1 // pred_check
      _
    $region19: #{self_attention_pallas.1} parent=1 // pred_check_branch
      %25 = sbr.rel (0) target = $region21
    $region20: #{self_attention_pallas.1} parent=1 // pred_region
      _
    $region21: #{self_attention_pallas.1} parent=1 // pred_fallthru
      _
    // Predicated region
    $region22: #{self_attention_pallas.1} parent=1 // pred_check
      _
    $region23: #{self_attention_pallas.1} parent=1 // pred_check_branch
      %27 = sbr.rel (0) target = $region25
    $region24: #{self_attention_pallas.1} parent=1 // pred_region
      _
    $region25: #{self_attention_pallas.1} parent=1 // pred_fallthru
      _
    // Predicated region
    $region26: #{self_attention_pallas.1} parent=1 // pred_check
      _
    $region27: #{self_attention_pallas.1} parent=1 // pred_check_branch
      %29 = sbr.rel (0) target = $region29
    $region28: #{self_attention_pallas.1} parent=1 // pred_region
      _
    $region29: #{self_attention_pallas.1} parent=1 // pred_fallthru
      _
    // Predicated region
    $region30: #{self_attention_pallas.1} parent=1 // pred_check
      _
    $region31: #{self_attention_pallas.1} parent=1 // pred_check_branch
      %31 = sbr.rel (0) target = $region33
    $region32: #{self_attention_pallas.1} parent=1 // pred_region
      _
    $region33: #{self_attention_pallas.1} parent=1 // pred_fallthru
      _
    // Predicated region
    $region34: #{self_attention_pallas.1} parent=1 // pred_check
      _
    $region35: #{self_attention_pallas.1} parent=1 // pred_check_branch
      %33 = sbr.rel (0) target = $region37
    $region36: #{self_attention_pallas.1} parent=1 // pred_region
      _
    $region37: #{self_attention_pallas.1} parent=1 // pred_fallthru
      _
    // Predicated region
    $region38: #{self_attention_pallas.1} parent=1 // pred_check
      _
    $region39: #{self_attention_pallas.1} parent=1 // pred_check_branch
      %35 = sbr.rel (0) target = $region41
    $region40: #{self_attention_pallas.1} parent=1 // pred_region
      _
    $region41: #{self_attention_pallas.1} parent=1 // pred_fallthru
      _
    %v36 = vld [vmem:[%s0] sm:$0xff]
    %v37 = vld [vmem:[%s0 + $0x8] sm:$0xff]
    %v38 = vld [vmem:[%s1] sm:$0xff]
    %v39 = vld [vmem:[%s1 + $0x8] sm:$0xff]
    %v40 = vld [vmem:[%s1 + $0x10] sm:$0xff]
    %v41 = vld [vmem:[%s1 + $0x18] sm:$0xff]
    %vm42 = vcmask 261120
    %v44 = vsel %vm42, %v36, 0
    %v47 = vsel %vm42, %v37, 0
    %49 = vmatprep.subr.mxu0 0.0
    %50 = vmatpush1.msra.mxu0 %v38
    %51 = vmatprep.subr.mxu0 0.0
    %52 = vmatpush1.msra.mxu0 %v39
    %53 = vmatprep.subr.mxu0 0.0
    %54 = vmatpush1.msra.mxu0 %v40
    %55 = vmatprep.subr.mxu0 0.0
    %56 = vmatpush1.msra.mxu0 %v41
    %57 = vmatprep.subr.mxu0 0.0
    %58 = vmatpush1.msra.mxu0 0.0
    %59 = vmatprep.subr.mxu0 0.0
    %60 = vmatpush1.msra.mxu0 0.0
    %61 = vmatprep.subr.mxu0 0.0
    %62 = vmatpush1.msra.mxu0 0.0
    %63 = vmatprep.subr.mxu0 0.0
    %64 = vmatpush1.msra.mxu0 0.0
    %65 = vmatprep.subr.mxu0 0.0
    %66 = vmatpush1.msra.mxu0 0.0
    %67 = vmatprep.subr.mxu0 0.0
    %68 = vmatpush1.msra.mxu0 0.0
    %69 = vmatprep.subr.mxu0 0.0
    %70 = vmatpush1.msra.mxu0 0.0
    %71 = vmatprep.subr.mxu0 0.0
    %72 = vmatpush1.msra.mxu0 0.0
    %73 = vmatprep.subr.mxu0 0.0
    %74 = vmatpush1.msra.mxu0 0.0
    %75 = vmatprep.subr.mxu0 0.0
    %76 = vmatpush1.msra.mxu0 0.0
    %77 = vmatprep.subr.mxu0 0.0
    %78 = vmatpush1.msra.mxu0 0.0
    %79 = vmatprep.subr.mxu0 0.0
    %80 = vmatpush1.msra.mxu0 0.0
    %81 = vmatprep.subr.mxu0 0.0
    %82 = vmatpush1.msra.mxu0 0.0
    %83 = vmatprep.subr.mxu0 0.0
    %84 = vmatpush1.msra.mxu0 0.0
    %85 = vmatprep.subr.mxu0 0.0
    %86 = vmatpush1.msra.mxu0 0.0
    %87 = vmatprep.subr.mxu0 0.0
    %88 = vmatpush1.msra.mxu0 0.0
    %89 = vmatprep.subr.mxu0 0.0
    %90 = vmatpush1.msra.mxu0 0.0
    %91 = vmatprep.subr.mxu0 0.0
    %92 = vmatpush1.msra.mxu0 0.0
    %93 = vmatprep.subr.mxu0 0.0
    %94 = vmatpush1.msra.mxu0 0.0
    %95 = vmatprep.subr.mxu0 0.0
    %96 = vmatpush1.msra.mxu0 0.0
    %97 = vmatprep.subr.mxu0 0.0
    %98 = vmatpush1.msra.mxu0 0.0
    %99 = vmatprep.subr.mxu0 0.0
    %100 = vmatpush1.msra.mxu0 0.0
    %101 = vmatprep.subr.mxu0 0.0
    %102 = vmatpush1.msra.mxu0 0.0
    %103 = vmatprep.subr.mxu0 0.0
    %104 = vmatpush1.msra.mxu0 0.0
    %105 = vmatprep.subr.mxu0 0.0
    %106 = vmatpush1.msra.mxu0 0.0
    %107 = vmatprep.subr.mxu0 0.0
    %108 = vmatpush1.msra.mxu0 0.0
    %109 = vmatprep.subr.mxu0 0.0
    %110 = vmatpush1.msra.mxu0 0.0
    %111 = vmatprep.subr.mxu0 0.0
    %112 = vmatpush1.msra.mxu0 0.0
    %113 = vmatprep.mubr.f32.mxu0 0.0
    %114 = vmatmul.mubr.f32.gmra.mrb[0].mxu0 %v44
    %v115 = vpop.f32.mrb[0].mxu0
    %v116 = vadd.f32 0.0, %v115
    %v117 = vpop.f32.mrb[0].mxu0
    %118 = vmatprep.mubr.f32.mxu0 0.0
    %119 = vmatmul.mubr.f32.gmra.mrb[0].mxu0 %v47
    %v120 = vpop.f32.mrb[0].mxu0
    %v121 = vadd.f32 0.0, %v120
    %v122 = vpop.f32.mrb[0].mxu0
    %123 = vdwg.mxu0
    %v124 = vld [vmem:[%s4] sm:$0xff]
    %v125 = vld [vmem:[%s4 + $0x8] sm:$0xff]
    %v126 = vld [vmem:[%s5] sm:$0xff]
    %v127 = vld [vmem:[%s5 + $0x8] sm:$0xff]
    %v128 = vld [vmem:[%s3] sm:$0xff]
    %v129 = vld [vmem:[%s3 + $0x8] sm:$0xff]
    %v130 = vld [vmem:[%s3 + $0x10] sm:$0xff]
    %v131 = vld [vmem:[%s3 + $0x18] sm:$0xff]
    %v132 = vmul.f32 %v116, %v124
    %v133 = vmul.f32 %v121, %v125
    %v135 = vsel %vm42, %v116, 0
    %v138 = vsel %vm42, %v121, 0
    %140 = vmatprep.subr.mxu0 0.0
    %141 = vmatpush1.msra.mxu0 %v128
    %142 = vmatprep.subr.mxu0 0.0
    %143 = vmatpush1.msra.mxu0 %v129
    %144 = vmatprep.subr.mxu0 0.0
    %145 = vmatpush1.msra.mxu0 %v130
    %146 = vmatprep.subr.mxu0 0.0
    %147 = vmatpush1.msra.mxu0 %v131
    %148 = vmatprep.subr.mxu0 0.0
    %149 = vmatpush1.msra.mxu0 0.0
    %150 = vmatprep.subr.mxu0 0.0
    %151 = vmatpush1.msra.mxu0 0.0
    %152 = vmatprep.subr.mxu0 0.0
    %153 = vmatpush1.msra.mxu0 0.0
    %154 = vmatprep.subr.mxu0 0.0
    %155 = vmatpush1.msra.mxu0 0.0
    %156 = vmatprep.subr.mxu0 0.0
    %157 = vmatpush1.msra.mxu0 0.0
    %158 = vmatprep.subr.mxu0 0.0
    %159 = vmatpush1.msra.mxu0 0.0
    %160 = vmatprep.subr.mxu0 0.0
    %161 = vmatpush1.msra.mxu0 0.0
    %162 = vmatprep.subr.mxu0 0.0
    %163 = vmatpush1.msra.mxu0 0.0
    %164 = vmatprep.subr.mxu0 0.0
    %165 = vmatpush1.msra.mxu0 0.0
    %166 = vmatprep.subr.mxu0 0.0
    %167 = vmatpush1.msra.mxu0 0.0
    %168 = vmatprep.subr.mxu0 0.0
    %169 = vmatpush1.msra.mxu0 0.0
    %170 = vmatprep.subr.mxu0 0.0
    %171 = vmatpush1.msra.mxu0 0.0
    %172 = vmatprep.subr.mxu0 0.0
    %173 = vmatpush1.msra.mxu0 0.0
    %174 = vmatprep.subr.mxu0 0.0
    %175 = vmatpush1.msra.mxu0 0.0
    %176 = vmatprep.subr.mxu0 0.0
    %177 = vmatpush1.msra.mxu0 0.0
    %178 = vmatprep.subr.mxu0 0.0
    %179 = vmatpush1.msra.mxu0 0.0
    %180 = vmatprep.subr.mxu0 0.0
    %181 = vmatpush1.msra.mxu0 0.0
    %182 = vmatprep.subr.mxu0 0.0
    %183 = vmatpush1.msra.mxu0 0.0
    %184 = vmatprep.subr.mxu0 0.0
    %185 = vmatpush1.msra.mxu0 0.0
    %186 = vmatprep.subr.mxu0 0.0
    %187 = vmatpush1.msra.mxu0 0.0
    %188 = vmatprep.subr.mxu0 0.0
    %189 = vmatpush1.msra.mxu0 0.0
    %190 = vmatprep.subr.mxu0 0.0
    %191 = vmatpush1.msra.mxu0 0.0
    %192 = vmatprep.subr.mxu0 0.0
    %193 = vmatpush1.msra.mxu0 0.0
    %194 = vmatprep.subr.mxu0 0.0
    %195 = vmatpush1.msra.mxu0 0.0
    %196 = vmatprep.subr.mxu0 0.0
    %197 = vmatpush1.msra.mxu0 0.0
    %198 = vmatprep.subr.mxu0 0.0
    %199 = vmatpush1.msra.mxu0 0.0
    %200 = vmatprep.subr.mxu0 0.0
    %201 = vmatpush1.msra.mxu0 0.0
    %202 = vmatprep.subr.mxu0 0.0
    %203 = vmatpush1.msra.mxu0 0.0
    %204 = vmatprep.mubr.f32.mxu0 0.0
    %205 = vmatmul.mubr.f32.gmra.mrb[0].mxu0 %v135
    %v206 = vpop.f32.mrb[0].mxu0
    %v207 = vadd.f32 0.0, %v206
    %v208 = vpop.f32.mrb[0].mxu0
    %209 = vmatprep.mubr.f32.mxu0 0.0
    %210 = vmatmul.mubr.f32.gmra.mrb[0].mxu0 %v138
    %v211 = vpop.f32.mrb[0].mxu0
    %v212 = vadd.f32 0.0, %v211
    %v213 = vpop.f32.mrb[0].mxu0
    %214 = vdwg.mxu0
    %v215 = vmul.f32 %v207, %v126
    %v216 = vmul.f32 %v212, %v127
    %v217 = vadd.f32 %v132, %v215
    %v218 = vadd.f32 %v133, %v216
    %221 = vrot.lane.b32.xlu0 %v124, 32
    %v222 = vpop.permute.xlu0 %221
    %223 = vrot.lane.b32.xlu0 %v125, 32
    %v224 = vpop.permute.xlu0 %223
    %v227 = vmul.f32 %v116, %v222
    %v228 = vmul.f32 %v121, %v224
    %229 = vrot.lane.b32.xlu0 %v116, 96
    %v230 = vpop.permute.xlu0 %229
    %231 = vrot.lane.b32.xlu0 %v121, 96
    %v232 = vpop.permute.xlu0 %231
    %v233 = vsel %vm42, %v230, 0
    %v235 = vsel %vm42, %v232, 0
    %237 = vmatprep.subr.mxu0 0.0
    %238 = vmatpush1.msra.mxu0 %v128
    %239 = vmatprep.subr.mxu0 0.0
    %240 = vmatpush1.msra.mxu0 %v129
    %241 = vmatprep.subr.mxu0 0.0
    %242 = vmatpush1.msra.mxu0 %v130
    %243 = vmatprep.subr.mxu0 0.0
    %244 = vmatpush1.msra.mxu0 %v131
    %245 = vmatprep.subr.mxu0 0.0
    %246 = vmatpush1.msra.mxu0 0.0
    %247 = vmatprep.subr.mxu0 0.0
    %248 = vmatpush1.msra.mxu0 0.0
    %249 = vmatprep.subr.mxu0 0.0
    %250 = vmatpush1.msra.mxu0 0.0
    %251 = vmatprep.subr.mxu0 0.0
    %252 = vmatpush1.msra.mxu0 0.0
    %253 = vmatprep.subr.mxu0 0.0
    %254 = vmatpush1.msra.mxu0 0.0
    %255 = vmatprep.subr.mxu0 0.0
    %256 = vmatpush1.msra.mxu0 0.0
    %257 = vmatprep.subr.mxu0 0.0
    %258 = vmatpush1.msra.mxu0 0.0
    %259 = vmatprep.subr.mxu0 0.0
    %260 = vmatpush1.msra.mxu0 0.0
    %261 = vmatprep.subr.mxu0 0.0
    %262 = vmatpush1.msra.mxu0 0.0
    %263 = vmatprep.subr.mxu0 0.0
    %264 = vmatpush1.msra.mxu0 0.0
    %265 = vmatprep.subr.mxu0 0.0
    %266 = vmatpush1.msra.mxu0 0.0
    %267 = vmatprep.subr.mxu0 0.0
    %268 = vmatpush1.msra.mxu0 0.0
    %269 = vmatprep.subr.mxu0 0.0
    %270 = vmatpush1.msra.mxu0 0.0
    %271 = vmatprep.subr.mxu0 0.0
    %272 = vmatpush1.msra.mxu0 0.0
    %273 = vmatprep.subr.mxu0 0.0
    %274 = vmatpush1.msra.mxu0 0.0
    %275 = vmatprep.subr.mxu0 0.0
    %276 = vmatpush1.msra.mxu0 0.0
    %277 = vmatprep.subr.mxu0 0.0
    %278 = vmatpush1.msra.mxu0 0.0
    %279 = vmatprep.subr.mxu0 0.0
    %280 = vmatpush1.msra.mxu0 0.0
    %281 = vmatprep.subr.mxu0 0.0
    %282 = vmatpush1.msra.mxu0 0.0
    %283 = vmatprep.subr.mxu0 0.0
    %284 = vmatpush1.msra.mxu0 0.0
    %285 = vmatprep.subr.mxu0 0.0
    %286 = vmatpush1.msra.mxu0 0.0
    %287 = vmatprep.subr.mxu0 0.0
    %288 = vmatpush1.msra.mxu0 0.0
    %289 = vmatprep.subr.mxu0 0.0
    %290 = vmatpush1.msra.mxu0 0.0
    %291 = vmatprep.subr.mxu0 0.0
    %292 = vmatpush1.msra.mxu0 0.0
    %293 = vmatprep.subr.mxu0 0.0
    %294 = vmatpush1.msra.mxu0 0.0
    %295 = vmatprep.subr.mxu0 0.0
    %296 = vmatpush1.msra.mxu0 0.0
    %297 = vmatprep.subr.mxu0 0.0
    %298 = vmatpush1.msra.mxu0 0.0
    %299 = vmatprep.subr.mxu0 0.0
    %300 = vmatpush1.msra.mxu0 0.0
    %301 = vmatprep.mubr.f32.mxu0 0.0
    %302 = vmatmul.mubr.f32.gmra.mrb[0].mxu0 %v233
    %v303 = vpop.f32.mrb[0].mxu0
    %v304 = vadd.f32 0.0, %v303
    %v305 = vpop.f32.mrb[0].mxu0
    %306 = vmatprep.mubr.f32.mxu0 0.0
    %307 = vmatmul.mubr.f32.gmra.mrb[0].mxu0 %v235
    %v308 = vpop.f32.mrb[0].mxu0
    %v309 = vadd.f32 0.0, %v308
    %v310 = vpop.f32.mrb[0].mxu0
    %311 = vdwg.mxu0
    %v312 = vmul.f32 %v304, %v126
    %v313 = vmul.f32 %v309, %v127
    %316 = vrot.lane.b32.xlu0 %v312, 32
    %v317 = vpop.permute.xlu0 %316
    %318 = vrot.lane.b32.xlu0 %v313, 32
    %v319 = vpop.permute.xlu0 %318
    %v322 = vadd.f32 %v227, %v317
    %v323 = vadd.f32 %v228, %v319
    %v324 = vld [vmem:[%s6] sm:$0xff]
    %v325 = vld [vmem:[%s6 + $0x8] sm:$0xff]
    %v326 = vld [vmem:[%s6 + $0x10] sm:$0xff]
    %v327 = vld [vmem:[%s6 + $0x18] sm:$0xff]
    %v328 = vmul.f32 %v217, %v217
    %v329 = vmul.f32 %v218, %v218
    %v331 = vsel %vm42, %v328, 0
    %v334 = vsel %vm42, %v329, 0
    %336 = vmatprep.subr.mxu0 0.0
    %337 = vmatpush1.msra.mxu0 %v324
    %338 = vmatprep.subr.mxu0 0.0
    %339 = vmatpush1.msra.mxu0 %v325
    %340 = vmatprep.subr.mxu0 0.0
    %341 = vmatpush1.msra.mxu0 %v326
    %342 = vmatprep.subr.mxu0 0.0
    %343 = vmatpush1.msra.mxu0 %v327
    %344 = vmatprep.subr.mxu0 0.0
    %345 = vmatpush1.msra.mxu0 0.0
    %346 = vmatprep.subr.mxu0 0.0
    %347 = vmatpush1.msra.mxu0 0.0
    %348 = vmatprep.subr.mxu0 0.0
    %349 = vmatpush1.msra.mxu0 0.0
    %350 = vmatprep.subr.mxu0 0.0
    %351 = vmatpush1.msra.mxu0 0.0
    %352 = vmatprep.subr.mxu0 0.0
    %353 = vmatpush1.msra.mxu0 0.0
    %354 = vmatprep.subr.mxu0 0.0
    %355 = vmatpush1.msra.mxu0 0.0
    %356 = vmatprep.subr.mxu0 0.0
    %357 = vmatpush1.msra.mxu0 0.0
    %358 = vmatprep.subr.mxu0 0.0
    %359 = vmatpush1.msra.mxu0 0.0
    %360 = vmatprep.subr.mxu0 0.0
    %361 = vmatpush1.msra.mxu0 0.0
    %362 = vmatprep.subr.mxu0 0.0
    %363 = vmatpush1.msra.mxu0 0.0
    %364 = vmatprep.subr.mxu0 0.0
    %365 = vmatpush1.msra.mxu0 0.0
    %366 = vmatprep.subr.mxu0 0.0
    %367 = vmatpush1.msra.mxu0 0.0
    %368 = vmatprep.subr.mxu0 0.0
    %369 = vmatpush1.msra.mxu0 0.0
    %370 = vmatprep.subr.mxu0 0.0
    %371 = vmatpush1.msra.mxu0 0.0
    %372 = vmatprep.subr.mxu0 0.0
    %373 = vmatpush1.msra.mxu0 0.0
    %374 = vmatprep.subr.mxu0 0.0
    %375 = vmatpush1.msra.mxu0 0.0
    %376 = vmatprep.subr.mxu0 0.0
    %377 = vmatpush1.msra.mxu0 0.0
    %378 = vmatprep.subr.mxu0 0.0
    %379 = vmatpush1.msra.mxu0 0.0
    %380 = vmatprep.subr.mxu0 0.0
    %381 = vmatpush1.msra.mxu0 0.0
    %382 = vmatprep.subr.mxu0 0.0
    %383 = vmatpush1.msra.mxu0 0.0
    %384 = vmatprep.subr.mxu0 0.0
    %385 = vmatpush1.msra.mxu0 0.0
    %386 = vmatprep.subr.mxu0 0.0
    %387 = vmatpush1.msra.mxu0 0.0
    %388 = vmatprep.subr.mxu0 0.0
    %389 = vmatpush1.msra.mxu0 0.0
    %390 = vmatprep.subr.mxu0 0.0
    %391 = vmatpush1.msra.mxu0 0.0
    %392 = vmatprep.subr.mxu0 0.0
    %393 = vmatpush1.msra.mxu0 0.0
    %394 = vmatprep.subr.mxu0 0.0
    %395 = vmatpush1.msra.mxu0 0.0
    %396 = vmatprep.subr.mxu0 0.0
    %397 = vmatpush1.msra.mxu0 0.0
    %398 = vmatprep.subr.mxu0 0.0
    %399 = vmatpush1.msra.mxu0 0.0
    %400 = vmatprep.mubr.f32.mxu0 0.0
    %401 = vmatmul.mubr.f32.gmra.mrb[0].mxu0 %v331
    %v402 = vpop.f32.mrb[0].mxu0
    %v403 = vadd.f32 0.0, %v402
    %v404 = vpop.f32.mrb[0].mxu0
    %405 = vmatprep.mubr.f32.mxu0 0.0
    %406 = vmatmul.mubr.f32.gmra.mrb[0].mxu0 %v334
    %v407 = vpop.f32.mrb[0].mxu0
    %v408 = vadd.f32 0.0, %v407
    %v409 = vpop.f32.mrb[0].mxu0
    %410 = vdwg.mxu0
    %v411 = vmax.f32 %v403, 1e-12
    %v412 = vmax.f32 %v408, 1e-12
    %v413 = vrsqrt.pop %v411
    %v414 = vrsqrt.pop %v412
    %v415 = vmul.f32 %v217, %v413
    %v416 = vmul.f32 %v218, %v414
    %v417 = vmul.f32 %v322, %v322
    %v418 = vmul.f32 %v323, %v323
    %421 = vrot.lane.b32.xlu0 %v417, 96
    %v422 = vpop.permute.xlu0 %421
    %423 = vrot.lane.b32.xlu0 %v418, 96
    %v424 = vpop.permute.xlu0 %423
    %v425 = vsel %vm42, %v422, 0
    %v427 = vsel %vm42, %v424, 0
    %429 = vmatprep.subr.mxu0 0.0
    %430 = vmatpush1.msra.mxu0 %v324
    %431 = vmatprep.subr.mxu0 0.0
    %432 = vmatpush1.msra.mxu0 %v325
    %433 = vmatprep.subr.mxu0 0.0
    %434 = vmatpush1.msra.mxu0 %v326
    %435 = vmatprep.subr.mxu0 0.0
    %436 = vmatpush1.msra.mxu0 %v327
    %437 = vmatprep.subr.mxu0 0.0
    %438 = vmatpush1.msra.mxu0 0.0
    %439 = vmatprep.subr.mxu0 0.0
    %440 = vmatpush1.msra.mxu0 0.0
    %441 = vmatprep.subr.mxu0 0.0
    %442 = vmatpush1.msra.mxu0 0.0
    %443 = vmatprep.subr.mxu0 0.0
    %444 = vmatpush1.msra.mxu0 0.0
    %445 = vmatprep.subr.mxu0 0.0
    %446 = vmatpush1.msra.mxu0 0.0
    %447 = vmatprep.subr.mxu0 0.0
    %448 = vmatpush1.msra.mxu0 0.0
    %449 = vmatprep.subr.mxu0 0.0
    %450 = vmatpush1.msra.mxu0 0.0
    %451 = vmatprep.subr.mxu0 0.0
    %452 = vmatpush1.msra.mxu0 0.0
    %453 = vmatprep.subr.mxu0 0.0
    %454 = vmatpush1.msra.mxu0 0.0
    %455 = vmatprep.subr.mxu0 0.0
    %456 = vmatpush1.msra.mxu0 0.0
    %457 = vmatprep.subr.mxu0 0.0
    %458 = vmatpush1.msra.mxu0 0.0
    %459 = vmatprep.subr.mxu0 0.0
    %460 = vmatpush1.msra.mxu0 0.0
    %461 = vmatprep.subr.mxu0 0.0
    %462 = vmatpush1.msra.mxu0 0.0
    %463 = vmatprep.subr.mxu0 0.0
    %464 = vmatpush1.msra.mxu0 0.0
    %465 = vmatprep.subr.mxu0 0.0
    %466 = vmatpush1.msra.mxu0 0.0
    %467 = vmatprep.subr.mxu0 0.0
    %468 = vmatpush1.msra.mxu0 0.0
    %469 = vmatprep.subr.mxu0 0.0
    %470 = vmatpush1.msra.mxu0 0.0
    %471 = vmatprep.subr.mxu0 0.0
    %472 = vmatpush1.msra.mxu0 0.0
    %473 = vmatprep.subr.mxu0 0.0
    %474 = vmatpush1.msra.mxu0 0.0
    %475 = vmatprep.subr.mxu0 0.0
    %476 = vmatpush1.msra.mxu0 0.0
    %477 = vmatprep.subr.mxu0 0.0
    %478 = vmatpush1.msra.mxu0 0.0
    %479 = vmatprep.subr.mxu0 0.0
    %480 = vmatpush1.msra.mxu0 0.0
    %481 = vmatprep.subr.mxu0 0.0
    %482 = vmatpush1.msra.mxu0 0.0
    %483 = vmatprep.subr.mxu0 0.0
    %484 = vmatpush1.msra.mxu0 0.0
    %485 = vmatprep.subr.mxu0 0.0
    %486 = vmatpush1.msra.mxu0 0.0
    %487 = vmatprep.subr.mxu0 0.0
    %488 = vmatpush1.msra.mxu0 0.0
    %489 = vmatprep.subr.mxu0 0.0
    %490 = vmatpush1.msra.mxu0 0.0
    %491 = vmatprep.subr.mxu0 0.0
    %492 = vmatpush1.msra.mxu0 0.0
    %493 = vmatprep.mubr.f32.mxu0 0.0
    %494 = vmatmul.mubr.f32.gmra.mrb[0].mxu0 %v425
    %v495 = vpop.f32.mrb[0].mxu0
    %v496 = vadd.f32 0.0, %v495
    %v497 = vpop.f32.mrb[0].mxu0
    %498 = vmatprep.mubr.f32.mxu0 0.0
    %499 = vmatmul.mubr.f32.gmra.mrb[0].mxu0 %v427
    %v500 = vpop.f32.mrb[0].mxu0
    %v501 = vadd.f32 0.0, %v500
    %v502 = vpop.f32.mrb[0].mxu0
    %503 = vdwg.mxu0
    %v504 = vmax.f32 %v496, 1e-12
    %v505 = vmax.f32 %v501, 1e-12
    %v506 = vrsqrt.pop %v504
    %v507 = vrsqrt.pop %v505
    %510 = vrot.lane.b32.xlu0 %v506, 32
    %v511 = vpop.permute.xlu0 %510
    %512 = vrot.lane.b32.xlu0 %v507, 32
    %v513 = vpop.permute.xlu0 %512
    %v516 = vmul.f32 %v322, %v511
    %v517 = vmul.f32 %v323, %v513
    %v518 = vld [vmem:[%s7] sm:$0xff]
    %v519 = vld [vmem:[%s7 + $0x8] sm:$0xff]
    %v520 = vld [vmem:[%s7 + $0x10] sm:$0xff]
    %v521 = vld [vmem:[%s7 + $0x18] sm:$0xff]
    %v522 = vld [vmem:[%s7 + $0x20] sm:$0xff]
    %v523 = vld [vmem:[%s7 + $0x28] sm:$0xff]
    %v524 = vld [vmem:[%s7 + $0x30] sm:$0xff]
    %v525 = vld [vmem:[%s7 + $0x38] sm:$0xff]
    %v526 = vmul.f32 %v415, %v518
    %v527 = vmul.f32 %v416, %v519
    %v528 = vmul.f32 %v415, %v520
    %v529 = vmul.f32 %v416, %v521
    %v530 = vmul.f32 %v415, %v522
    %v531 = vmul.f32 %v416, %v523
    %v532 = vmul.f32 %v415, %v524
    %v533 = vmul.f32 %v416, %v525
    %v534 = vld [vmem:[%s9] sm:$0xff]
    %v535 = vld [vmem:[%s9 + $0x8] sm:$0xff]
    %v536 = vld [vmem:[%s9 + $0x10] sm:$0xff]
    %v537 = vld [vmem:[%s9 + $0x18] sm:$0xff]
    %v538 = vld [vmem:[%s9 + $0x20] sm:$0xff]
    %v539 = vld [vmem:[%s9 + $0x28] sm:$0xff]
    %v540 = vld [vmem:[%s9 + $0x30] sm:$0xff]
    %v541 = vld [vmem:[%s9 + $0x38] sm:$0xff]
    %544 = vrot.lane.b32.xlu0 %v516, 96
    %v545 = vpop.permute.xlu0 %544
    %546 = vrot.lane.b32.xlu0 %v517, 96
    %v547 = vpop.permute.xlu0 %546
    %v549 = vsel %vm42, %v526, 0
    %v552 = vsel %vm42, %v527, 0
    %v555 = vsel %vm42, %v528, 0
    %v558 = vsel %vm42, %v529, 0
    %v561 = vsel %vm42, %v530, 0
    %v564 = vsel %vm42, %v531, 0
    %v567 = vsel %vm42, %v532, 0
    %v570 = vsel %vm42, %v533, 0
    %v572 = vsel %vm42, %v545, 0
    %v574 = vsel %vm42, %v547, 0
    %576 = vmatprep.subr.mxu0 0.0
    %577 = vmatpush1.xpose.msra.mxu0 %v572
    %578 = vmatprep.subr.mxu0 0.0
    %579 = vmatpush1.xpose.msra.mxu0 %v574
    %580 = vmatprep.subr.mxu0 0.0
    %581 = vmatpush1.xpose.msra.mxu0 0.0
    %582 = vmatprep.subr.mxu0 0.0
    %583 = vmatpush1.xpose.msra.mxu0 0.0
    %584 = vmatprep.subr.mxu0 0.0
    %585 = vmatpush1.xpose.msra.mxu0 0.0
    %586 = vmatprep.subr.mxu0 0.0
    %587 = vmatpush1.xpose.msra.mxu0 0.0
    %588 = vmatprep.subr.mxu0 0.0
    %589 = vmatpush1.xpose.msra.mxu0 0.0
    %590 = vmatprep.subr.mxu0 0.0
    %591 = vmatpush1.xpose.msra.mxu0 0.0
    %592 = vmatprep.subr.mxu0 0.0
    %593 = vmatpush1.xpose.msra.mxu0 0.0
    %594 = vmatprep.subr.mxu0 0.0
    %595 = vmatpush1.xpose.msra.mxu0 0.0
    %596 = vmatprep.subr.mxu0 0.0
    %597 = vmatpush1.xpose.msra.mxu0 0.0
    %598 = vmatprep.subr.mxu0 0.0
    %599 = vmatpush1.xpose.msra.mxu0 0.0
    %600 = vmatprep.subr.mxu0 0.0
    %601 = vmatpush1.xpose.msra.mxu0 0.0
    %602 = vmatprep.subr.mxu0 0.0
    %603 = vmatpush1.xpose.msra.mxu0 0.0
    %604 = vmatprep.subr.mxu0 0.0
    %605 = vmatpush1.xpose.msra.mxu0 0.0
    %606 = vmatprep.subr.mxu0 0.0
    %607 = vmatpush1.xpose.msra.mxu0 0.0
    %608 = vmatprep.subr.mxu0 0.0
    %609 = vmatpush1.xpose.msra.mxu0 0.0
    %610 = vmatprep.subr.mxu0 0.0
    %611 = vmatpush1.xpose.msra.mxu0 0.0
    %612 = vmatprep.subr.mxu0 0.0
    %613 = vmatpush1.xpose.msra.mxu0 0.0
    %614 = vmatprep.subr.mxu0 0.0
    %615 = vmatpush1.xpose.msra.mxu0 0.0
    %616 = vmatprep.subr.mxu0 0.0
    %617 = vmatpush1.xpose.msra.mxu0 0.0
    %618 = vmatprep.subr.mxu0 0.0
    %619 = vmatpush1.xpose.msra.mxu0 0.0
    %620 = vmatprep.subr.mxu0 0.0
    %621 = vmatpush1.xpose.msra.mxu0 0.0
    %622 = vmatprep.subr.mxu0 0.0
    %623 = vmatpush1.xpose.msra.mxu0 0.0
    %624 = vmatprep.subr.mxu0 0.0
    %625 = vmatpush1.xpose.msra.mxu0 0.0
    %626 = vmatprep.subr.mxu0 0.0
    %627 = vmatpush1.xpose.msra.mxu0 0.0
    %628 = vmatprep.subr.mxu0 0.0
    %629 = vmatpush1.xpose.msra.mxu0 0.0
    %630 = vmatprep.subr.mxu0 0.0
    %631 = vmatpush1.xpose.msra.mxu0 0.0
    %632 = vmatprep.subr.mxu0 0.0
    %633 = vmatpush1.xpose.msra.mxu0 0.0
    %634 = vmatprep.subr.mxu0 0.0
    %635 = vmatpush1.xpose.msra.mxu0 0.0
    %636 = vmatprep.subr.mxu0 0.0
    %637 = vmatpush1.xpose.msra.mxu0 0.0
    %638 = vmatprep.subr.mxu0 0.0
    %639 = vmatpush1.xpose.msra.mxu0 0.0
    %640 = vmatprep.mubr.f32.mxu0 0.0
    %641 = vmatmul.mubr.f32.gmra.mrb[0].mxu0 %v549
    %v642 = vpop.f32.mrb[0].mxu0
    %v643 = vadd.f32 %v534, %v642
    %v644 = vpop.f32.mrb[0].mxu0
    %645 = vmatprep.mubr.f32.mxu0 0.0
    %646 = vmatmul.mubr.f32.gmra.mrb[0].mxu0 %v552
    %v647 = vpop.f32.mrb[0].mxu0
    %v648 = vadd.f32 %v535, %v647
    %v649 = vpop.f32.mrb[0].mxu0
    %650 = vmatprep.mubr.f32.mxu0 0.0
    %651 = vmatmul.mubr.f32.gmra.mrb[0].mxu0 %v555
    %v652 = vpop.f32.mrb[0].mxu0
    %v653 = vadd.f32 %v536, %v652
    %v654 = vpop.f32.mrb[0].mxu0
    %655 = vmatprep.mubr.f32.mxu0 0.0
    %656 = vmatmul.mubr.f32.gmra.mrb[0].mxu0 %v558
    %v657 = vpop.f32.mrb[0].mxu0
    %v658 = vadd.f32 %v537, %v657
    %v659 = vpop.f32.mrb[0].mxu0
    %660 = vmatprep.mubr.f32.mxu0 0.0
    %661 = vmatmul.mubr.f32.gmra.mrb[0].mxu0 %v561
    %v662 = vpop.f32.mrb[0].mxu0
    %v663 = vadd.f32 %v538, %v662
    %v664 = vpop.f32.mrb[0].mxu0
    %665 = vmatprep.mubr.f32.mxu0 0.0
    %666 = vmatmul.mubr.f32.gmra.mrb[0].mxu0 %v564
    %v667 = vpop.f32.mrb[0].mxu0
    %v668 = vadd.f32 %v539, %v667
    %v669 = vpop.f32.mrb[0].mxu0
    %670 = vmatprep.mubr.f32.mxu0 0.0
    %671 = vmatmul.mubr.f32.gmra.mrb[0].mxu0 %v567
    %v672 = vpop.f32.mrb[0].mxu0
    %v673 = vadd.f32 %v540, %v672
    %v674 = vpop.f32.mrb[0].mxu0
    %675 = vmatprep.mubr.f32.mxu0 0.0
    %676 = vmatmul.mubr.f32.gmra.mrb[0].mxu0 %v570
    %v677 = vpop.f32.mrb[0].mxu0
    %v678 = vadd.f32 %v541, %v677
    %v679 = vpop.f32.mrb[0].mxu0
    %680 = vdwg.mxu0
    %v681 = vmul.f32 %v643, 1.442695
    %v682 = vpow.pop %v681
    %v683 = vmul.f32 %v648, 1.442695
    %v684 = vpow.pop %v683
    %v685 = vmul.f32 %v653, 1.442695
    %v686 = vpow.pop %v685
    %v687 = vmul.f32 %v658, 1.442695
    %v688 = vpow.pop %v687
    %v689 = vmul.f32 %v663, 1.442695
    %v690 = vpow.pop %v689
    %v691 = vmul.f32 %v668, 1.442695
    %v692 = vpow.pop %v691
    %v693 = vmul.f32 %v673, 1.442695
    %v694 = vpow.pop %v693
    %v695 = vmul.f32 %v678, 1.442695
    %v696 = vpow.pop %v695
    %vm697 = vcmask 130048
    %v698 = vsel %vm697, %v682, 0.0
    %699 = vadd.xlane.f32.xlu0 %v698
    %v700 = vpop.xlane.xlu0 %699
    %v701 = vsel %vm697, %v684, 0.0
    %702 = vadd.xlane.f32.xlu0 %v701
    %v703 = vpop.xlane.xlu0 %702
    %v704 = vsel %vm697, %v686, 0.0
    %705 = vadd.xlane.f32.xlu0 %v704
    %v706 = vpop.xlane.xlu0 %705
    %v707 = vsel %vm697, %v688, 0.0
    %708 = vadd.xlane.f32.xlu0 %v707
    %v709 = vpop.xlane.xlu0 %708
    %v710 = vsel %vm697, %v690, 0.0
    %711 = vadd.xlane.f32.xlu0 %v710
    %v712 = vpop.xlane.xlu0 %711
    %v713 = vsel %vm697, %v692, 0.0
    %714 = vadd.xlane.f32.xlu0 %v713
    %v715 = vpop.xlane.xlu0 %714
    %v716 = vsel %vm697, %v694, 0.0
    %717 = vadd.xlane.f32.xlu0 %v716
    %v718 = vpop.xlane.xlu0 %717
    %v719 = vsel %vm697, %v696, 0.0
    %720 = vadd.xlane.f32.xlu0 %v719
    %v721 = vpop.xlane.xlu0 %720
    %v722 = vrcp.pop %v700
    %v723 = vrcp.pop %v703
    %v724 = vrcp.pop %v706
    %v725 = vrcp.pop %v709
    %v726 = vrcp.pop %v712
    %v727 = vrcp.pop %v715
    %v728 = vrcp.pop %v718
    %v729 = vrcp.pop %v721
    %v730 = vmul.f32 %v700, %v722
    %v731 = vmul.f32 %v703, %v723
    %v732 = vmul.f32 %v706, %v724
    %v733 = vmul.f32 %v709, %v725
    %v734 = vmul.f32 %v712, %v726
    %v735 = vmul.f32 %v715, %v727
    %v736 = vmul.f32 %v718, %v728
    %v737 = vmul.f32 %v721, %v729
    %v738 = vsub.f32 2.0, %v730
    %v739 = vsub.f32 2.0, %v731
    %v740 = vsub.f32 2.0, %v732
    %v741 = vsub.f32 2.0, %v733
    %v742 = vsub.f32 2.0, %v734
    %v743 = vsub.f32 2.0, %v735
    %v744 = vsub.f32 2.0, %v736
    %v745 = vsub.f32 2.0, %v737
    %v746 = vmul.f32 %v722, %v738
    %v747 = vmul.f32 %v723, %v739
    %v748 = vmul.f32 %v724, %v740
    %v749 = vmul.f32 %v725, %v741
    %v750 = vmul.f32 %v726, %v742
    %v751 = vmul.f32 %v727, %v743
    %v752 = vmul.f32 %v728, %v744
    %v753 = vmul.f32 %v729, %v745
    %754 = vrot.lane.b32.xlu0 %v116, 64
    %v755 = vpop.permute.xlu0 %754
    %756 = vrot.lane.b32.xlu0 %v121, 64
    %v757 = vpop.permute.xlu0 %756
    %v761 = vsel %vm697, %v682, 0
    %v764 = vsel %vm697, %v684, 0
    %v767 = vsel %vm697, %v686, 0
    %v770 = vsel %vm697, %v688, 0
    %v773 = vsel %vm697, %v690, 0
    %v776 = vsel %vm697, %v692, 0
    %v779 = vsel %vm697, %v694, 0
    %v782 = vsel %vm697, %v696, 0
    %784 = vmatprep.subr.mxu0 0.0
    %785 = vmatpush1.msra.mxu0 %v755
    %786 = vmatprep.subr.mxu0 0.0
    %787 = vmatpush1.msra.mxu0 %v757
    %788 = vmatprep.subr.mxu0 0.0
    %789 = vmatpush1.msra.mxu0 0.0
    %790 = vmatprep.subr.mxu0 0.0
    %791 = vmatpush1.msra.mxu0 0.0
    %792 = vmatprep.subr.mxu0 0.0
    %793 = vmatpush1.msra.mxu0 0.0
    %794 = vmatprep.subr.mxu0 0.0
    %795 = vmatpush1.msra.mxu0 0.0
    %796 = vmatprep.subr.mxu0 0.0
    %797 = vmatpush1.msra.mxu0 0.0
    %798 = vmatprep.subr.mxu0 0.0
    %799 = vmatpush1.msra.mxu0 0.0
    %800 = vmatprep.subr.mxu0 0.0
    %801 = vmatpush1.msra.mxu0 0.0
    %802 = vmatprep.subr.mxu0 0.0
    %803 = vmatpush1.msra.mxu0 0.0
    %804 = vmatprep.subr.mxu0 0.0
    %805 = vmatpush1.msra.mxu0 0.0
    %806 = vmatprep.subr.mxu0 0.0
    %807 = vmatpush1.msra.mxu0 0.0
    %808 = vmatprep.subr.mxu0 0.0
    %809 = vmatpush1.msra.mxu0 0.0
    %810 = vmatprep.subr.mxu0 0.0
    %811 = vmatpush1.msra.mxu0 0.0
    %812 = vmatprep.subr.mxu0 0.0
    %813 = vmatpush1.msra.mxu0 0.0
    %814 = vmatprep.subr.mxu0 0.0
    %815 = vmatpush1.msra.mxu0 0.0
    %816 = vmatprep.subr.mxu0 0.0
    %817 = vmatpush1.msra.mxu0 0.0
    %818 = vmatprep.subr.mxu0 0.0
    %819 = vmatpush1.msra.mxu0 0.0
    %820 = vmatprep.subr.mxu0 0.0
    %821 = vmatpush1.msra.mxu0 0.0
    %822 = vmatprep.subr.mxu0 0.0
    %823 = vmatpush1.msra.mxu0 0.0
    %824 = vmatprep.subr.mxu0 0.0
    %825 = vmatpush1.msra.mxu0 0.0
    %826 = vmatprep.subr.mxu0 0.0
    %827 = vmatpush1.msra.mxu0 0.0
    %828 = vmatprep.subr.mxu0 0.0
    %829 = vmatpush1.msra.mxu0 0.0
    %830 = vmatprep.subr.mxu0 0.0
    %831 = vmatpush1.msra.mxu0 0.0
    %832 = vmatprep.subr.mxu0 0.0
    %833 = vmatpush1.msra.mxu0 0.0
    %834 = vmatprep.subr.mxu0 0.0
    %835 = vmatpush1.msra.mxu0 0.0
    %836 = vmatprep.subr.mxu0 0.0
    %837 = vmatpush1.msra.mxu0 0.0
    %838 = vmatprep.subr.mxu0 0.0
    %839 = vmatpush1.msra.mxu0 0.0
    %840 = vmatprep.subr.mxu0 0.0
    %841 = vmatpush1.msra.mxu0 0.0
    %842 = vmatprep.subr.mxu0 0.0
    %843 = vmatpush1.msra.mxu0 0.0
    %844 = vmatprep.subr.mxu0 0.0
    %845 = vmatpush1.msra.mxu0 0.0
    %846 = vmatprep.subr.mxu0 0.0
    %847 = vmatpush1.msra.mxu0 0.0
    %848 = vmatprep.mubr.f32.mxu0 0.0
    %849 = vmatmul.mubr.f32.gmra.mrb[0].mxu0 %v761
    %v850 = vpop.f32.mrb[0].mxu0
    %v851 = vadd.f32 0.0, %v850
    %v852 = vpop.f32.mrb[0].mxu0
    %853 = vmatprep.mubr.f32.mxu0 0.0
    %854 = vmatmul.mubr.f32.gmra.mrb[0].mxu0 %v764
    %v855 = vpop.f32.mrb[0].mxu0
    %v856 = vadd.f32 0.0, %v855
    %v857 = vpop.f32.mrb[0].mxu0
    %858 = vmatprep.mubr.f32.mxu0 0.0
    %859 = vmatmul.mubr.f32.gmra.mrb[0].mxu0 %v767
    %v860 = vpop.f32.mrb[0].mxu0
    %v861 = vadd.f32 0.0, %v860
    %v862 = vpop.f32.mrb[0].mxu0
    %863 = vmatprep.mubr.f32.mxu0 0.0
    %864 = vmatmul.mubr.f32.gmra.mrb[0].mxu0 %v770
    %v865 = vpop.f32.mrb[0].mxu0
    %v866 = vadd.f32 0.0, %v865
    %v867 = vpop.f32.mrb[0].mxu0
    %868 = vmatprep.mubr.f32.mxu0 0.0
    %869 = vmatmul.mubr.f32.gmra.mrb[0].mxu0 %v773
    %v870 = vpop.f32.mrb[0].mxu0
    %v871 = vadd.f32 0.0, %v870
    %v872 = vpop.f32.mrb[0].mxu0
    %873 = vmatprep.mubr.f32.mxu0 0.0
    %874 = vmatmul.mubr.f32.gmra.mrb[0].mxu0 %v776
    %v875 = vpop.f32.mrb[0].mxu0
    %v876 = vadd.f32 0.0, %v875
    %v877 = vpop.f32.mrb[0].mxu0
    %878 = vmatprep.mubr.f32.mxu0 0.0
    %879 = vmatmul.mubr.f32.gmra.mrb[0].mxu0 %v779
    %v880 = vpop.f32.mrb[0].mxu0
    %v881 = vadd.f32 0.0, %v880
    %v882 = vpop.f32.mrb[0].mxu0
    %883 = vmatprep.mubr.f32.mxu0 0.0
    %884 = vmatmul.mubr.f32.gmra.mrb[0].mxu0 %v782
    %v885 = vpop.f32.mrb[0].mxu0
    %v886 = vadd.f32 0.0, %v885
    %v887 = vpop.f32.mrb[0].mxu0
    %888 = vdwg.mxu0
    %v889 = vmul.f32 %v851, %v746
    %v890 = vmul.f32 %v856, %v747
    %v891 = vmul.f32 %v861, %v748
    %v892 = vmul.f32 %v866, %v749
    %v893 = vmul.f32 %v871, %v750
    %v894 = vmul.f32 %v876, %v751
    %v895 = vmul.f32 %v881, %v752
    %v896 = vmul.f32 %v886, %v753
    %v897 = vld [vmem:[%s8] sm:$0xff]
    %v898 = vld [vmem:[%s8 + $0x8] sm:$0xff]
    %v899 = vld [vmem:[%s8 + $0x10] sm:$0xff]
    %v900 = vld [vmem:[%s8 + $0x18] sm:$0xff]
    %v901 = vld [vmem:[%s8 + $0x20] sm:$0xff]
    %v902 = vld [vmem:[%s8 + $0x28] sm:$0xff]
    %v903 = vld [vmem:[%s8 + $0x30] sm:$0xff]
    %v904 = vld [vmem:[%s8 + $0x38] sm:$0xff]
    %v905 = vmul.f32 %v889, %v897
    %v906 = vmul.f32 %v890, %v898
    %v907 = vmul.f32 %v891, %v899
    %v908 = vmul.f32 %v892, %v900
    %v909 = vmul.f32 %v893, %v901
    %v910 = vmul.f32 %v894, %v902
    %v911 = vmul.f32 %v895, %v903
    %v912 = vmul.f32 %v896, %v904
    %v913 = vadd.f32 %v905, %v907
    %v914 = vadd.f32 %v906, %v908
    %v915 = vadd.f32 %v913, %v909
    %v916 = vadd.f32 %v914, %v910
    %v917 = vadd.f32 %v915, %v911
    %v918 = vadd.f32 %v916, %v912
    %v919 = vld [vmem:[%s2] sm:$0xff]
    %v920 = vld [vmem:[%s2 + $0x8] sm:$0xff]
    %v921 = vld [vmem:[%s2 + $0x10] sm:$0xff]
    %v922 = vld [vmem:[%s2 + $0x18] sm:$0xff]
    %v924 = vsel %vm42, %v917, 0
    %v927 = vsel %vm42, %v918, 0
    %929 = vmatprep.subr.mxu0 0.0
    %930 = vmatpush1.msra.mxu0 %v919
    %931 = vmatprep.subr.mxu0 0.0
    %932 = vmatpush1.msra.mxu0 %v920
    %933 = vmatprep.subr.mxu0 0.0
    %934 = vmatpush1.msra.mxu0 %v921
    %935 = vmatprep.subr.mxu0 0.0
    %936 = vmatpush1.msra.mxu0 %v922
    %937 = vmatprep.subr.mxu0 0.0
    %938 = vmatpush1.msra.mxu0 0.0
    %939 = vmatprep.subr.mxu0 0.0
    %940 = vmatpush1.msra.mxu0 0.0
    %941 = vmatprep.subr.mxu0 0.0
    %942 = vmatpush1.msra.mxu0 0.0
    %943 = vmatprep.subr.mxu0 0.0
    %944 = vmatpush1.msra.mxu0 0.0
    %945 = vmatprep.subr.mxu0 0.0
    %946 = vmatpush1.msra.mxu0 0.0
    %947 = vmatprep.subr.mxu0 0.0
    %948 = vmatpush1.msra.mxu0 0.0
    %949 = vmatprep.subr.mxu0 0.0
    %950 = vmatpush1.msra.mxu0 0.0
    %951 = vmatprep.subr.mxu0 0.0
    %952 = vmatpush1.msra.mxu0 0.0
    %953 = vmatprep.subr.mxu0 0.0
    %954 = vmatpush1.msra.mxu0 0.0
    %955 = vmatprep.subr.mxu0 0.0
    %956 = vmatpush1.msra.mxu0 0.0
    %957 = vmatprep.subr.mxu0 0.0
    %958 = vmatpush1.msra.mxu0 0.0
    %959 = vmatprep.subr.mxu0 0.0
    %960 = vmatpush1.msra.mxu0 0.0
    %961 = vmatprep.subr.mxu0 0.0
    %962 = vmatpush1.msra.mxu0 0.0
    %963 = vmatprep.subr.mxu0 0.0
    %964 = vmatpush1.msra.mxu0 0.0
    %965 = vmatprep.subr.mxu0 0.0
    %966 = vmatpush1.msra.mxu0 0.0
    %967 = vmatprep.subr.mxu0 0.0
    %968 = vmatpush1.msra.mxu0 0.0
    %969 = vmatprep.subr.mxu0 0.0
    %970 = vmatpush1.msra.mxu0 0.0
    %971 = vmatprep.subr.mxu0 0.0
    %972 = vmatpush1.msra.mxu0 0.0
    %973 = vmatprep.subr.mxu0 0.0
    %974 = vmatpush1.msra.mxu0 0.0
    %975 = vmatprep.subr.mxu0 0.0
    %976 = vmatpush1.msra.mxu0 0.0
    %977 = vmatprep.subr.mxu0 0.0
    %978 = vmatpush1.msra.mxu0 0.0
    %979 = vmatprep.subr.mxu0 0.0
    %980 = vmatpush1.msra.mxu0 0.0
    %981 = vmatprep.subr.mxu0 0.0
    %982 = vmatpush1.msra.mxu0 0.0
    %983 = vmatprep.subr.mxu0 0.0
    %984 = vmatpush1.msra.mxu0 0.0
    %985 = vmatprep.subr.mxu0 0.0
    %986 = vmatpush1.msra.mxu0 0.0
    %987 = vmatprep.subr.mxu0 0.0
    %988 = vmatpush1.msra.mxu0 0.0
    %989 = vmatprep.subr.mxu0 0.0
    %990 = vmatpush1.msra.mxu0 0.0
    %991 = vmatprep.subr.mxu0 0.0
    %992 = vmatpush1.msra.mxu0 0.0
    %993 = vmatprep.mubr.f32.mxu0 0.0
    %994 = vmatmul.mubr.f32.gmra.mrb[0].mxu0 %v924
    %v995 = vpop.f32.mrb[0].mxu0
    %v996 = vadd.f32 0.0, %v995
    %v997 = vpop.f32.mrb[0].mxu0
    %998 = vmatprep.mubr.f32.mxu0 0.0
    %999 = vmatmul.mubr.f32.gmra.mrb[0].mxu0 %v927
    %v1000 = vpop.f32.mrb[0].mxu0
    %v1001 = vadd.f32 0.0, %v1000
    %v1002 = vpop.f32.mrb[0].mxu0
    %1003 = vdwg.mxu0
    %1004 = vst.msk [vmem:[#allocation2] sm:$0xff] %vm42, %v996
    %1005 = vst.msk [vmem:[#allocation2 + $0x8] sm:$0xff] %vm42, %v1001
    // Predicated region
    $region42: #{self_attention_pallas.1} parent=1 // pred_check
      _
    $region43: #{self_attention_pallas.1} parent=1 // pred_check_branch
      %1007 = sbr.rel (0) target = $region45
    $region44: #{self_attention_pallas.1} parent=1 // pred_region
      %s1009 = ssub.s32 256, 256
      %1010 = vsyncadd [#allocation3], %s1009
      %s1011 = sshll.u32 [#allocation2], 4
      %s1012 = int_to_ptr.vmem [resolvable:$true] %s1011
      %1017 = dma.vmem_to_hbm [thread:$0]  %s1012, 256, %s10, [#allocation3], 128, 128, 8
    $region45: #{self_attention_pallas.1} parent=1 // pred_fallthru
      _
    // Predicated region
    $region46: #{self_attention_pallas.1} parent=1 // pred_check
      _
    $region47: #{self_attention_pallas.1} parent=1 // pred_check_branch
      %1019 = sbr.rel (0) target = $region49
    $region48: #{self_attention_pallas.1} parent=1 // pred_region
      %1020 = dma.done [#allocation3], 256
    $region49: #{self_attention_pallas.1} parent=1 // pred_fallthru
      _
    %1021 = vsyncpa [#allocation3], 1

</llo_original>
